<compile_context>
chip_gen: v5e
topology: v5e:2x2
jax: 0.10.0
libtpu: 0.0.40
codegen_flags: <defaults>
</compile_context>

<pallas_src>
import functools

import jax
import jax.numpy as jnp
from jax.experimental import pallas as pl
from jax.experimental.pallas import tpu as pltpu

_LN_EPS = 1e-5      # torch.nn.LayerNorm default eps
_TB_MAX = 256       # batch tile size (multiple of 8; sized for v7x's 64 MiB VMEM)


def _critic_kernel(x_ref, w1_ref, w23_ref, w4r_ref, bias_ref, ln_ref, out_ref,
                   *, compute_dtype):
    """One grid step = one critic x one batch tile.

    x_ref   : (TB, D)       input tile (already cast to compute_dtype)
    w1_ref  : (1, D, H)     layer-1 weight of this critic
    w23_ref : (1, 2, H, H)  layer-2 / layer-3 weights stacked (single DMA)
    w4r_ref : (1, 1, H)     layer-4 weight as a row vector
    bias_ref: (1, 4, H)     rows 0..2 = hidden biases, row 3 = final bias (broadcast)
    ln_ref  : (2, 3, H)     [gammas; betas] for the 3 LayerNorms (shared, f32)
    out_ref : (1, 1, TB)    q-values of this critic for this tile (batch on lanes)
    """
    x = x_ref[...]
    bias = bias_ref[0]                      # (4, H) f32
    ln = ln_ref[...]                        # (2, 3, H) f32
    gam = ln[0]                             # (3, H)
    bet = ln[1]                             # (3, H)

    def mm(a, w):
        # MXU matmul in compute_dtype (bf16 in production), f32 accumulation.
        return jnp.dot(a.astype(compute_dtype), w,
                       preferred_element_type=jnp.float32)

    def ln_relu(h, l):
        # Per-row LayerNorm via XLU lane reductions (MXU stays free), all in f32.
        # Centered second moment -> no E[x^2]-mu^2 cancellation.
        mu = jnp.mean(h, axis=-1, keepdims=True)
        c = h - mu
        var = jnp.mean(c * c, axis=-1, keepdims=True)
        hn = c * jax.lax.rsqrt(var + _LN_EPS)
        hn = hn * gam[l:l + 1] + bet[l:l + 1]
        return jnp.maximum(hn, 0.0)

    h = mm(x, w1_ref[0]) + bias[0:1]
    h = ln_relu(h, 0)
    h = mm(h, w23_ref[0, 0]) + bias[1:2]
    h = ln_relu(h, 1)
    h = mm(h, w23_ref[0, 1]) + bias[2:3]
    h = ln_relu(h, 2)
    # Layer 4 as q^T = w4_row @ h^T  -> (1, TB): batch lands on the lane axis, so the
    # store is lane-dense and no wrapper-side transpose is needed.
    q = jax.lax.dot_general(
        w4r_ref[0], h.astype(compute_dtype),
        dimension_numbers=(((1,), (1,)), ((), ())),
        preferred_element_type=jnp.float32)
    q = q + bias[3:4, 0:1]                  # per-critic scalar final bias
    out_ref[...] = q[None]


def pack_params(params, compute_dtype=jnp.float32):
    """One-time packing of EnsembledCritic params for the kernel.

    Run once per parameter update (NOT per forward call). Weights are stored in
    compute_dtype (bf16 halves weight DMA bytes); biases / LN params stay f32.
    """
    w1, b1, w2, b2, w3, b3, w4, b4, gammas, betas = params
    E, D, H = w1.shape
    W1 = w1.astype(compute_dtype)                                    # (E, D, H)
    W23 = jnp.stack([w2, w3], axis=1).astype(compute_dtype)          # (E, 2, H, H)
    W4r = jnp.transpose(w4, (0, 2, 1)).astype(compute_dtype)         # (E, 1, H)
    BIAS = jnp.stack(
        [b1[:, 0, :], b2[:, 0, :], b3[:, 0, :],
         jnp.broadcast_to(b4[:, 0, :], (E, H))],
        axis=1).astype(jnp.float32)                                  # (E, 4, H)
    LN = jnp.stack([gammas, betas], axis=0).astype(jnp.float32)      # (2, 3, H)
    return (W1, W23, W4r, BIAS, LN)


def ensembled_critic_forward(state, action, packed):
    """state: (B, S), action: (B, A)  ->  q_values: (E, B)."""
    W1, W23, W4r, BIAS, LN = packed
    E, D, H = W1.shape
    compute_dtype = W1.dtype

    x = jnp.concatenate([state, action], axis=-1).astype(compute_dtype)   # (B, D)
    B = x.shape[0]
    assert x.shape[1] == D, "state_dim + action_dim must match packed params"

    # Batch tiling: bounds the live (TB,H) activations and gives the grid multiple
    # parallel steps (ensemble x batch tiles) for v7x megacore sharding.
    if B <= _TB_MAX:
        TB, B_pad = B, B
    else:
        TB = _TB_MAX
        B_pad = -(-B // TB) * TB
        x = jnp.pad(x, ((0, B_pad - B), (0, 0)))
    NB = B_pad // TB

    kernel = functools.partial(_critic_kernel, compute_dtype=compute_dtype)
    out = pl.pallas_call(
        kernel,
        out_shape=jax.ShapeDtypeStruct((E, 1, B_pad), jnp.float32),
        grid_spec=pltpu.PrefetchScalarGridSpec(
            num_scalar_prefetch=0,
            # Batch is the inner axis -> per-critic weight blocks stay resident
            # (their block indices don't change) across the batch sweep.
            grid=(E, NB),
            in_specs=[
                pl.BlockSpec((TB, D), lambda e, b: (b, 0)),             # x tile
                pl.BlockSpec((1, D, H), lambda e, b: (e, 0, 0)),        # W1
                pl.BlockSpec((1, 2, H, H), lambda e, b: (e, 0, 0, 0)),  # W2/W3 stacked
                pl.BlockSpec((1, 1, H), lambda e, b: (e, 0, 0)),        # W4 row
                pl.BlockSpec((1, 4, H), lambda e, b: (e, 0, 0)),        # biases 1..3 + final
                pl.BlockSpec((2, 3, H), lambda e, b: (0, 0, 0)),        # LN gamma/beta
            ],
            out_specs=pl.BlockSpec((1, 1, TB), lambda e, b: (e, 0, b)),
        ),
        compiler_params=pltpu.CompilerParams(
            dimension_semantics=("parallel", "parallel")),
    )(x, W1, W23, W4r, BIAS, LN)

    return out[:, 0, :B]                                             # (E, B)


def init_params(key, state_dim, action_dim, hidden_dim, num_critics):
    """Deterministic init mirroring EnsembledLinear.reset_parameters + edac_init."""
    D = state_dim + action_dim
    H = hidden_dim
    E = num_critics
    ks = jax.random.split(key, 8)

    def kaiming_uniform(k, shape, fan_in):
        bound = 1.0 / jnp.sqrt(jnp.float32(fan_in))   # kaiming_uniform with a=sqrt(5)
        return jax.random.uniform(k, shape, jnp.float32, -bound, bound)

    # Hidden-layer weights (kaiming uniform), biases = 0.1 (edac_init)
    w1 = kaiming_uniform(ks[0], (E, D, H), D)
    b1 = jnp.full((E, 1, H), 0.1, jnp.float32)
    w2 = kaiming_uniform(ks[1], (E, H, H), H)
    b2 = jnp.full((E, 1, H), 0.1, jnp.float32)
    w3 = kaiming_uniform(ks[2], (E, H, H), H)
    b3 = jnp.full((E, 1, H), 0.1, jnp.float32)
    # Final layer: uniform(-0.003, 0.003) for both weight and bias (edac_init)
    w4 = jax.random.uniform(ks[3], (E, H, 1), jnp.float32, -0.003, 0.003)
    b4 = jax.random.uniform(ks[4], (E, 1, 1), jnp.float32, -0.003, 0.003)
    # LayerNorm params (3 layer norms, default ones / zeros)
    gammas = jnp.ones((3, H), jnp.float32)
    betas = jnp.zeros((3, H), jnp.float32)
    return (w1, b1, w2, b2, w3, b3, w4, b4, gammas, betas)


def reference_forward(state, action, params):
    """Pure-JAX reference mirroring the PyTorch module semantics (f32, highest precision)."""
    w1, b1, w2, b2, w3, b3, w4, b4, gammas, betas = params
    E = w1.shape[0]
    x = jnp.concatenate([state, action], axis=-1)[None]             # (1, B, D)
    x = jnp.repeat(x, E, axis=0)                                     # (E, B, D)

    def ln(h, g, b):
        mu = jnp.mean(h, axis=-1, keepdims=True)
        var = jnp.mean((h - mu) ** 2, axis=-1, keepdims=True)
        return (h - mu) * jax.lax.rsqrt(var + _LN_EPS) * g + b

    ein = lambda a, w: jnp.einsum('ebd,edh->ebh', a, w, precision='highest')
    h = ein(x, w1) + b1
    h = jnp.maximum(ln(h, gammas[0], betas[0]), 0.0)
    h = ein(h, w2) + b2
    h = jnp.maximum(ln(h, gammas[1], betas[1]), 0.0)
    h = ein(h, w3) + b3
    h = jnp.maximum(ln(h, gammas[2], betas[2]), 0.0)
    q = ein(h, w4) + b4                                              # (E, B, 1)
    return q[..., 0]                                                 # (E, B)


if __name__ == "__main__":
    state_dim, action_dim, hidden_dim, num_critics = 12, 4, 32, 2
    batch = 8

    key = jax.random.PRNGKey(0)
    k_s, k_a, k_p = jax.random.split(key, 3)
    state = jax.random.normal(k_s, (batch, state_dim), jnp.float32)
    action = jax.random.normal(k_a, (batch, action_dim), jnp.float32)
    params = init_params(k_p, state_dim, action_dim, hidden_dim, num_critics)
    q_ref = reference_forward(state, action, params)

    # f32 matmul path: tight check against the pure-JAX reference.
    packed_f32 = pack_params(params, compute_dtype=jnp.float32)
    q = jax.block_until_ready(ensembled_critic_forward(state, action, packed_f32))
    assert q.shape == (num_critics, batch)
    assert jnp.allclose(q, q_ref, atol=1e-4, rtol=1e-4), "f32 kernel mismatch vs reference"

    # bf16 matmul-operand path (production MXU rate; f32 LN / affine / accumulation).
    # Tolerance is loose by design: bf16 operands carry ~8 fewer mantissa bits.
    packed_bf16 = pack_params(params, compute_dtype=jnp.bfloat16)
    q_bf16 = jax.block_until_ready(ensembled_critic_forward(state, action, packed_bf16))
    assert q_bf16.shape == (num_critics, batch)
    assert bool(jnp.all(jnp.isfinite(q_bf16)))
    assert jnp.allclose(q_bf16, q_ref, atol=5e-2, rtol=5e-2), "bf16 kernel diverged"

    print("KERNEL_OK")
</pallas_src>

<mosaic_0001>
module attributes {stable_mosaic.version = 11 : i64} {
  func.func @_critic_kernel(%arg0: i32, %arg1: i32, %arg2: memref<8x16xf32, #tpu.memory_space<vmem>>, %arg3: memref<1x16x32xf32, #tpu.memory_space<vmem>>, %arg4: memref<1x2x32x32xf32, #tpu.memory_space<vmem>>, %arg5: memref<1x1x32xf32, #tpu.memory_space<vmem>>, %arg6: memref<1x4x32xf32, #tpu.memory_space<vmem>>, %arg7: memref<2x3x32xf32, #tpu.memory_space<vmem>>, %arg8: memref<1x1x8xf32, #tpu.memory_space<vmem>>) attributes {dimension_semantics = [#tpu.dimension_semantics<parallel>, #tpu.dimension_semantics<parallel>], iteration_bounds = array<i64: 2, 1>, scalar_prefetch = 0 : i64, scratch_operands = 0 : i64, tpu.core_type = #tpu.core_type<tc>, window_params = [{transform_indices = @transform_0, window_bounds = array<i64: 8, 16>}, {transform_indices = @transform_1, window_bounds = array<i64: 1, 16, 32>}, {transform_indices = @transform_2, window_bounds = array<i64: 1, 2, 32, 32>}, {transform_indices = @transform_3, window_bounds = array<i64: 1, 1, 32>}, {transform_indices = @transform_4, window_bounds = array<i64: 1, 4, 32>}, {pipeline_mode = #tpu.pipeline_mode<synchronous>, transform_indices = @transform_5, window_bounds = array<i64: 2, 3, 32>}, {transform_indices = @transform_6, window_bounds = array<i64: 1, 1, 8>}]} {
    %c0 = arith.constant 0 : index
    %c0_0 = arith.constant 0 : index
    %0 = vector.load %arg2[%c0, %c0_0] : memref<8x16xf32, #tpu.memory_space<vmem>>, vector<8x16xf32>
    %c0_1 = arith.constant 0 : index
    %c0_2 = arith.constant 0 : index
    %c0_3 = arith.constant 0 : index
    %1 = vector.load %arg6[%c0_1, %c0_2, %c0_3] : memref<1x4x32xf32, #tpu.memory_space<vmem>>, vector<1x4x32xf32>
    %2 = vector.shape_cast %1 : vector<1x4x32xf32> to vector<4x32xf32>
    %c0_4 = arith.constant 0 : index
    %c0_5 = arith.constant 0 : index
    %c0_6 = arith.constant 0 : index
    %3 = vector.load %arg7[%c0_4, %c0_5, %c0_6] : memref<2x3x32xf32, #tpu.memory_space<vmem>>, vector<2x3x32xf32>
    %4 = vector.extract_strided_slice %3 {offsets = [0, 0, 0], sizes = [1, 3, 32], strides = [1, 1, 1]} : vector<2x3x32xf32> to vector<1x3x32xf32>
    %5 = vector.shape_cast %4 : vector<1x3x32xf32> to vector<3x32xf32>
    %6 = vector.extract_strided_slice %3 {offsets = [1, 0, 0], sizes = [1, 3, 32], strides = [1, 1, 1]} : vector<2x3x32xf32> to vector<1x3x32xf32>
    %7 = vector.shape_cast %6 : vector<1x3x32xf32> to vector<3x32xf32>
    %c0_7 = arith.constant 0 : index
    %c0_8 = arith.constant 0 : index
    %c0_9 = arith.constant 0 : index
    %8 = vector.load %arg3[%c0_7, %c0_8, %c0_9] : memref<1x16x32xf32, #tpu.memory_space<vmem>>, vector<1x16x32xf32>
    %9 = vector.shape_cast %8 : vector<1x16x32xf32> to vector<16x32xf32>
    %cst = arith.constant dense<0.000000e+00> : vector<8x32xf32>
    %10 = tpu.matmul %0, %9, %cst {dimension_numbers = #tpu.dot_dimension_numbers<[1], [0], [0], [1], [0, 0, 1, 1], [], []>} : vector<8x16xf32>, vector<16x32xf32>, vector<8x32xf32> -> vector<8x32xf32>
    %11 = vector.extract_strided_slice %2 {offsets = [0, 0], sizes = [1, 32], strides = [1, 1]} : vector<4x32xf32> to vector<1x32xf32>
    %12 = vector.broadcast %11 : vector<1x32xf32> to vector<8x32xf32>
    %13 = arith.addf %10, %12 : vector<8x32xf32>
    %cst_10 = arith.constant dense<0.000000e+00> : vector<8xf32>
    %14 = vector.multi_reduction <add>, %13, %cst_10 [1] : vector<8x32xf32> to vector<8xf32>
    %15 = vector.shape_cast %14 : vector<8xf32> to vector<8x1xf32>
    %cst_11 = arith.constant 3.200000e+01 : f32
    %16 = vector.broadcast %cst_11 : f32 to vector<8x1xf32>
    %17 = arith.divf %15, %16 : vector<8x1xf32>
    %18 = vector.broadcast %17 : vector<8x1xf32> to vector<8x32xf32>
    %19 = arith.subf %13, %18 : vector<8x32xf32>
    %20 = arith.mulf %19, %19 : vector<8x32xf32>
    %cst_12 = arith.constant dense<0.000000e+00> : vector<8xf32>
    %21 = vector.multi_reduction <add>, %20, %cst_12 [1] : vector<8x32xf32> to vector<8xf32>
    %22 = vector.shape_cast %21 : vector<8xf32> to vector<8x1xf32>
    %cst_13 = arith.constant 3.200000e+01 : f32
    %23 = vector.broadcast %cst_13 : f32 to vector<8x1xf32>
    %24 = arith.divf %22, %23 : vector<8x1xf32>
    %cst_14 = arith.constant 9.99999974E-6 : f32
    %25 = vector.broadcast %cst_14 : f32 to vector<8x1xf32>
    %26 = arith.addf %24, %25 : vector<8x1xf32>
    %27 = math.rsqrt %26 : vector<8x1xf32>
    %28 = vector.broadcast %27 : vector<8x1xf32> to vector<8x32xf32>
    %29 = arith.mulf %19, %28 : vector<8x32xf32>
    %30 = vector.extract_strided_slice %5 {offsets = [0, 0], sizes = [1, 32], strides = [1, 1]} : vector<3x32xf32> to vector<1x32xf32>
    %31 = vector.broadcast %30 : vector<1x32xf32> to vector<8x32xf32>
    %32 = arith.mulf %29, %31 : vector<8x32xf32>
    %33 = vector.extract_strided_slice %7 {offsets = [0, 0], sizes = [1, 32], strides = [1, 1]} : vector<3x32xf32> to vector<1x32xf32>
    %34 = vector.broadcast %33 : vector<1x32xf32> to vector<8x32xf32>
    %35 = arith.addf %32, %34 : vector<8x32xf32>
    %cst_15 = arith.constant 0.000000e+00 : f32
    %36 = vector.broadcast %cst_15 : f32 to vector<8x32xf32>
    %37 = arith.maximumf %35, %36 : vector<8x32xf32>
    %c0_16 = arith.constant 0 : index
    %c0_17 = arith.constant 0 : index
    %c0_18 = arith.constant 0 : index
    %c0_19 = arith.constant 0 : index
    %38 = vector.load %arg4[%c0_16, %c0_17, %c0_18, %c0_19] : memref<1x2x32x32xf32, #tpu.memory_space<vmem>>, vector<1x1x32x32xf32>
    %39 = vector.shape_cast %38 : vector<1x1x32x32xf32> to vector<32x32xf32>
    %cst_20 = arith.constant dense<0.000000e+00> : vector<8x32xf32>
    %40 = tpu.matmul %37, %39, %cst_20 {dimension_numbers = #tpu.dot_dimension_numbers<[1], [0], [0], [1], [0, 0, 1, 1], [], []>} : vector<8x32xf32>, vector<32x32xf32>, vector<8x32xf32> -> vector<8x32xf32>
    %41 = vector.extract_strided_slice %2 {offsets = [1, 0], sizes = [1, 32], strides = [1, 1]} : vector<4x32xf32> to vector<1x32xf32>
    %42 = vector.broadcast %41 : vector<1x32xf32> to vector<8x32xf32>
    %43 = arith.addf %40, %42 : vector<8x32xf32>
    %cst_21 = arith.constant dense<0.000000e+00> : vector<8xf32>
    %44 = vector.multi_reduction <add>, %43, %cst_21 [1] : vector<8x32xf32> to vector<8xf32>
    %45 = vector.shape_cast %44 : vector<8xf32> to vector<8x1xf32>
    %cst_22 = arith.constant 3.200000e+01 : f32
    %46 = vector.broadcast %cst_22 : f32 to vector<8x1xf32>
    %47 = arith.divf %45, %46 : vector<8x1xf32>
    %48 = vector.broadcast %47 : vector<8x1xf32> to vector<8x32xf32>
    %49 = arith.subf %43, %48 : vector<8x32xf32>
    %50 = arith.mulf %49, %49 : vector<8x32xf32>
    %cst_23 = arith.constant dense<0.000000e+00> : vector<8xf32>
    %51 = vector.multi_reduction <add>, %50, %cst_23 [1] : vector<8x32xf32> to vector<8xf32>
    %52 = vector.shape_cast %51 : vector<8xf32> to vector<8x1xf32>
    %cst_24 = arith.constant 3.200000e+01 : f32
    %53 = vector.broadcast %cst_24 : f32 to vector<8x1xf32>
    %54 = arith.divf %52, %53 : vector<8x1xf32>
    %cst_25 = arith.constant 9.99999974E-6 : f32
    %55 = vector.broadcast %cst_25 : f32 to vector<8x1xf32>
    %56 = arith.addf %54, %55 : vector<8x1xf32>
    %57 = math.rsqrt %56 : vector<8x1xf32>
    %58 = vector.broadcast %57 : vector<8x1xf32> to vector<8x32xf32>
    %59 = arith.mulf %49, %58 : vector<8x32xf32>
    %60 = vector.extract_strided_slice %5 {offsets = [1, 0], sizes = [1, 32], strides = [1, 1]} : vector<3x32xf32> to vector<1x32xf32>
    %61 = vector.broadcast %60 : vector<1x32xf32> to vector<8x32xf32>
    %62 = arith.mulf %59, %61 : vector<8x32xf32>
    %63 = vector.extract_strided_slice %7 {offsets = [1, 0], sizes = [1, 32], strides = [1, 1]} : vector<3x32xf32> to vector<1x32xf32>
    %64 = vector.broadcast %63 : vector<1x32xf32> to vector<8x32xf32>
    %65 = arith.addf %62, %64 : vector<8x32xf32>
    %cst_26 = arith.constant 0.000000e+00 : f32
    %66 = vector.broadcast %cst_26 : f32 to vector<8x32xf32>
    %67 = arith.maximumf %65, %66 : vector<8x32xf32>
    %c0_27 = arith.constant 0 : index
    %c1 = arith.constant 1 : index
    %c0_28 = arith.constant 0 : index
    %c0_29 = arith.constant 0 : index
    %68 = vector.load %arg4[%c0_27, %c1, %c0_28, %c0_29] : memref<1x2x32x32xf32, #tpu.memory_space<vmem>>, vector<1x1x32x32xf32>
    %69 = vector.shape_cast %68 : vector<1x1x32x32xf32> to vector<32x32xf32>
    %cst_30 = arith.constant dense<0.000000e+00> : vector<8x32xf32>
    %70 = tpu.matmul %67, %69, %cst_30 {dimension_numbers = #tpu.dot_dimension_numbers<[1], [0], [0], [1], [0, 0, 1, 1], [], []>} : vector<8x32xf32>, vector<32x32xf32>, vector<8x32xf32> -> vector<8x32xf32>
    %71 = vector.extract_strided_slice %2 {offsets = [2, 0], sizes = [1, 32], strides = [1, 1]} : vector<4x32xf32> to vector<1x32xf32>
    %72 = vector.broadcast %71 : vector<1x32xf32> to vector<8x32xf32>
    %73 = arith.addf %70, %72 : vector<8x32xf32>
    %cst_31 = arith.constant dense<0.000000e+00> : vector<8xf32>
    %74 = vector.multi_reduction <add>, %73, %cst_31 [1] : vector<8x32xf32> to vector<8xf32>
    %75 = vector.shape_cast %74 : vector<8xf32> to vector<8x1xf32>
    %cst_32 = arith.constant 3.200000e+01 : f32
    %76 = vector.broadcast %cst_32 : f32 to vector<8x1xf32>
    %77 = arith.divf %75, %76 : vector<8x1xf32>
    %78 = vector.broadcast %77 : vector<8x1xf32> to vector<8x32xf32>
    %79 = arith.subf %73, %78 : vector<8x32xf32>
    %80 = arith.mulf %79, %79 : vector<8x32xf32>
    %cst_33 = arith.constant dense<0.000000e+00> : vector<8xf32>
    %81 = vector.multi_reduction <add>, %80, %cst_33 [1] : vector<8x32xf32> to vector<8xf32>
    %82 = vector.shape_cast %81 : vector<8xf32> to vector<8x1xf32>
    %cst_34 = arith.constant 3.200000e+01 : f32
    %83 = vector.broadcast %cst_34 : f32 to vector<8x1xf32>
    %84 = arith.divf %82, %83 : vector<8x1xf32>
    %cst_35 = arith.constant 9.99999974E-6 : f32
    %85 = vector.broadcast %cst_35 : f32 to vector<8x1xf32>
    %86 = arith.addf %84, %85 : vector<8x1xf32>
    %87 = math.rsqrt %86 : vector<8x1xf32>
    %88 = vector.broadcast %87 : vector<8x1xf32> to vector<8x32xf32>
    %89 = arith.mulf %79, %88 : vector<8x32xf32>
    %90 = vector.extract_strided_slice %5 {offsets = [2, 0], sizes = [1, 32], strides = [1, 1]} : vector<3x32xf32> to vector<1x32xf32>
    %91 = vector.broadcast %90 : vector<1x32xf32> to vector<8x32xf32>
    %92 = arith.mulf %89, %91 : vector<8x32xf32>
    %93 = vector.extract_strided_slice %7 {offsets = [2, 0], sizes = [1, 32], strides = [1, 1]} : vector<3x32xf32> to vector<1x32xf32>
    %94 = vector.broadcast %93 : vector<1x32xf32> to vector<8x32xf32>
    %95 = arith.addf %92, %94 : vector<8x32xf32>
    %cst_36 = arith.constant 0.000000e+00 : f32
    %96 = vector.broadcast %cst_36 : f32 to vector<8x32xf32>
    %97 = arith.maximumf %95, %96 : vector<8x32xf32>
    %c0_37 = arith.constant 0 : index
    %c0_38 = arith.constant 0 : index
    %c0_39 = arith.constant 0 : index
    %98 = vector.load %arg5[%c0_37, %c0_38, %c0_39] : memref<1x1x32xf32, #tpu.memory_space<vmem>>, vector<1x1x32xf32>
    %99 = vector.shape_cast %98 : vector<1x1x32xf32> to vector<1x32xf32>
    %cst_40 = arith.constant dense<0.000000e+00> : vector<1x8xf32>
    %100 = tpu.matmul %99, %97, %cst_40 {dimension_numbers = #tpu.dot_dimension_numbers<[1], [1], [0], [0], [0, 0, 1, 0], [], []>} : vector<1x32xf32>, vector<8x32xf32>, vector<1x8xf32> -> vector<1x8xf32>
    %101 = vector.extract_strided_slice %2 {offsets = [3, 0], sizes = [1, 1], strides = [1, 1]} : vector<4x32xf32> to vector<1x1xf32>
    %102 = vector.broadcast %101 : vector<1x1xf32> to vector<1x8xf32>
    %103 = arith.addf %100, %102 : vector<1x8xf32>
    %104 = vector.shape_cast %103 : vector<1x8xf32> to vector<1x1x8xf32>
    %c0_41 = arith.constant 0 : index
    %c0_42 = arith.constant 0 : index
    %c0_43 = arith.constant 0 : index
    %105 = vector.load %arg8[%c0_41, %c0_42, %c0_43] : memref<1x1x8xf32, #tpu.memory_space<vmem>>, vector<1x1x8xf32>
    tpu.vector_store %arg8[%c0_41, %c0_42, %c0_43], %104 {strides = array<i32>} : memref<1x1x8xf32, #tpu.memory_space<vmem>>, vector<1x1x8xf32>,
    return
  }
  func.func @transform_0(%arg0: i32, %arg1: i32) -> (i32, i32) {
    %c0_i32 = arith.constant 0 : i32
    %c0_i32_0 = arith.constant 0 : i32
    return %arg1, %c0_i32 : i32, i32
  }
  func.func @transform_1(%arg0: i32, %arg1: i32) -> (i32, i32, i32) {
    %c0_i32 = arith.constant 0 : i32
    %c0_i32_0 = arith.constant 0 : i32
    %c0_i32_1 = arith.constant 0 : i32
    return %arg0, %c0_i32, %c0_i32_0 : i32, i32, i32
  }
  func.func @transform_2(%arg0: i32, %arg1: i32) -> (i32, i32, i32, i32) {
    %c0_i32 = arith.constant 0 : i32
    %c0_i32_0 = arith.constant 0 : i32
    %c0_i32_1 = arith.constant 0 : i32
    %c0_i32_2 = arith.constant 0 : i32
    return %arg0, %c0_i32, %c0_i32_0, %c0_i32_1 : i32, i32, i32, i32
  }
  func.func @transform_3(%arg0: i32, %arg1: i32) -> (i32, i32, i32) {
    %c0_i32 = arith.constant 0 : i32
    %c0_i32_0 = arith.constant 0 : i32
    %c0_i32_1 = arith.constant 0 : i32
    return %arg0, %c0_i32, %c0_i32_0 : i32, i32, i32
  }
  func.func @transform_4(%arg0: i32, %arg1: i32) -> (i32, i32, i32) {
    %c0_i32 = arith.constant 0 : i32
    %c0_i32_0 = arith.constant 0 : i32
    %c0_i32_1 = arith.constant 0 : i32
    return %arg0, %c0_i32, %c0_i32_0 : i32, i32, i32
  }
  func.func @transform_5(%arg0: i32, %arg1: i32) -> (i32, i32, i32) {
    %c0_i32 = arith.constant 0 : i32
    %c0_i32_0 = arith.constant 0 : i32
    %c0_i32_1 = arith.constant 0 : i32
    %c0_i32_2 = arith.constant 0 : i32
    return %c0_i32, %c0_i32_0, %c0_i32_1 : i32, i32, i32
  }
  func.func @transform_6(%arg0: i32, %arg1: i32) -> (i32, i32, i32) {
    %c0_i32 = arith.constant 0 : i32
    %c0_i32_0 = arith.constant 0 : i32
    return %arg0, %c0_i32, %arg1 : i32, i32, i32
  }
}

</mosaic_0001>

<llo_original>
// kernel: tpu_custom_call.1
$region0: #{tpu_custom_call.1}
  #allocation0 [shape = 'u32[]', space=smem, size = 0x4, offset = 0x4, fixed_abs, tag = 'smem constant byte address 0x4 - core index']
  #allocation1 [shape = 'u32[72,128]{1,0:T(1,128)}', space=vmem, size = 0x9000, scoped, tag = 'internal scratch']
  %s0 = inlined_call_operand.vmem [shape: f32[8,16], index: 0, kind: input, shape index: {}]
  %s1 = inlined_call_operand.hbm [shape: f32[2,16,32], index: 1, kind: input, shape index: {}]
  %s2 = inlined_call_operand.hbm [shape: f32[2,2,32,32], index: 2, kind: input, shape index: {}]
  %s3 = inlined_call_operand.hbm [shape: f32[2,1,32], index: 3, kind: input, shape index: {}]
  %s4 = inlined_call_operand.vmem [shape: f32[2,4,32], index: 4, kind: input, shape index: {}]
  %s5 = inlined_call_operand.vmem [shape: f32[2,3,32], index: 5, kind: input, shape index: {}]
  %s6 = inlined_call_operand.hbm [shape: f32[2,1,8], index: 6, kind: output, shape index: {}]
  %s7 = sld [smem:[#allocation0]]
  $region69: #{tpu_custom_call.1} parent=0
    _
  %s9 = ssub.s32 1, %s7
  %s10 = scalar_select 0, %s9, %s7
  $region1: #{tpu_custom_call.1} parent=0
    #allocation2 [shape = 'u8[16384]{0}', space=vmem, size = 0x4000, scoped, tag = 'input window, operand 1']
    #allocation3 [shape = 's32[2]{0}', space=sflag, size = 0x8, scoped, tag = 'scoped memory for tpu_custom_call.1']
    #allocation4 [shape = 's32[2]{0}', space=sflag, size = 0x8, scoped, tag = 'scoped memory for tpu_custom_call.1']
    #allocation5 [shape = 'u8[65536]{0}', space=vmem, size = 0x10000, scoped, tag = 'input window, operand 2']
    #allocation6 [shape = 's32[2]{0}', space=sflag, size = 0x8, scoped, tag = 'scoped memory for tpu_custom_call.1']
    #allocation7 [shape = 'u8[1024]{0}', space=vmem, size = 0x400, scoped, tag = 'input window, operand 3']
    #allocation8 [shape = 'u8[1024]{0}', space=vmem, size = 0x400, scoped, tag = 'output window, operand 0']
    %11 = vsyncpa [#allocation3], 0
    %s12 = scalar_lea.sflag [#allocation3], 1
    %13 = vsyncpa %s12, 0
    %14 = vsyncpa [#allocation6], 0
    %s15 = scalar_lea.sflag [#allocation6], 1
    %16 = vsyncpa %s15, 0
    %17 = vsyncpa [#allocation4], 0
    %s18 = scalar_lea.sflag [#allocation4], 1
    %19 = vsyncpa %s18, 0
    loop: start=0, step=1, limit=4
    $region2: #{tpu_custom_call.1} parent=1 // loop_pre_header
      _
    $region3: #{tpu_custom_call.1} parent=1 // loop_header
      %s21 = sphi 0, %s25
      %p22 = scmp.ge.s32.totalorder %s21, 4
      %s28 = sphi 0, %s40
      %s29 = sphi 0, %s36
      %s30 = sphi 0, %s28
      %s31 = sphi 0, %s29
      %s32 = sphi 0, %s30
      %s33 = sphi 0, %s31
      %s43 = sphi 0, %s45
      %s46 = sphi 0, %s43
      %s47 = sphi 0, %s46
      %s63 = sphi 0, %s47
      %s69 = sphi 0, %s71
      %s72 = sphi 0, %s69
      %s73 = sphi 0, %s72
      %s89 = sphi 0, %s73
      %s95 = sphi 0, %s97
      %s98 = sphi 0, %s95
      %s99 = sphi 0, %s98
      %s115 = sphi 0, %s99
      %s121 = sphi 0, %s123
      %s124 = sphi 0, %s121
      %s125 = sphi 0, %s124
      %s141 = sphi 0, %s125
      %s147 = sphi 0, %s149
      %s150 = sphi 0, %s147
      %s151 = sphi 0, %s150
      %s167 = sphi 0, %s151
      %s171 = sphi 0, %s171
      %s173 = sphi 0, %s171
      %s174 = sphi 0, %s173
      %s188 = sphi 0, %s174
      %s196 = sphi 0, %s198
      %s199 = sphi 0, %s196
      %s200 = sphi 0, %s199
      %s216 = sphi 0, %s200
    $region4: #{tpu_custom_call.1} parent=1 // loop_header_branch
      %24 = sbr.rel (%p22) target = $region8
    $region5: #{tpu_custom_call.1} parent=1 // loop_body
      %s26 = ssub.s32 %s21, 1
      %s27 = ssub.s32 %s21, 2
      %s34 = sadd.s32 1, %s29
      %p35 = scmp.ge.s32.totalorder %s34, 1
      %s36 = scalar_select %p35, 0, %s34
      %s37 = sadd.s32 1, %s28
      %s38 = scalar_select %p35, %s37, %s28
      %p39 = scmp.ge.s32.totalorder %s38, 2
      %s40 = scalar_select %p39, 0, %s38
      %s41 = ssub.s32 %s29, %s36
      %p42 = scmp.eq.s32.totalorder %s41, 0
      %s44 = sadd.s32 %s43, 1
      %s45 = scalar_select %p42, %s43, %s44
      %p48 = pneg %p42
      %p49 = scmp.eq.s32.totalorder %s21, 1
      %p50 = por %p48, %p49
      %p51 = scmp.ne.s32.totalorder %s43, %s46
      %p52 = scmp.eq.s32.totalorder %s21, 0
      %p53 = por %p51, %p52
      %p54 = scmp.ne.s32.totalorder %s43, %s46
      %p55 = scmp.eq.s32.totalorder %s26, 1
      %p56 = por %p54, %p55
      %p57 = scmp.ne.s32.totalorder %s46, %s47
      %p58 = scmp.eq.s32.totalorder %s26, 0
      %p59 = por %p57, %p58
      %p60 = scmp.ne.s32.totalorder %s46, %s47
      %p61 = scmp.eq.s32.totalorder %s27, 1
      %p62 = por %p60, %p61
      %p64 = scmp.ne.s32.totalorder %s47, %s63
      %p65 = scmp.eq.s32.totalorder %s27, 0
      %p66 = por %p64, %p65
      %s67 = ssub.s32 %s28, %s40
      %p68 = scmp.eq.s32.totalorder %s67, 0
      %s70 = sadd.s32 %s69, 1
      %s71 = scalar_select %p68, %s69, %s70
      %p74 = pneg %p68
      %p75 = scmp.eq.s32.totalorder %s21, 1
      %p76 = por %p74, %p75
      %p77 = scmp.ne.s32.totalorder %s69, %s72
      %p78 = scmp.eq.s32.totalorder %s21, 0
      %p79 = por %p77, %p78
      %p80 = scmp.ne.s32.totalorder %s69, %s72
      %p81 = scmp.eq.s32.totalorder %s26, 1
      %p82 = por %p80, %p81
      %p83 = scmp.ne.s32.totalorder %s72, %s73
      %p84 = scmp.eq.s32.totalorder %s26, 0
      %p85 = por %p83, %p84
      %p86 = scmp.ne.s32.totalorder %s72, %s73
      %p87 = scmp.eq.s32.totalorder %s27, 1
      %p88 = por %p86, %p87
      %p90 = scmp.ne.s32.totalorder %s73, %s89
      %p91 = scmp.eq.s32.totalorder %s27, 0
      %p92 = por %p90, %p91
      %s93 = ssub.s32 %s28, %s40
      %p94 = scmp.eq.s32.totalorder %s93, 0
      %s96 = sadd.s32 %s95, 1
      %s97 = scalar_select %p94, %s95, %s96
      %p100 = pneg %p94
      %p101 = scmp.eq.s32.totalorder %s21, 1
      %p102 = por %p100, %p101
      %p103 = scmp.ne.s32.totalorder %s95, %s98
      %p104 = scmp.eq.s32.totalorder %s21, 0
      %p105 = por %p103, %p104
      %p106 = scmp.ne.s32.totalorder %s95, %s98
      %p107 = scmp.eq.s32.totalorder %s26, 1
      %p108 = por %p106, %p107
      %p109 = scmp.ne.s32.totalorder %s98, %s99
      %p110 = scmp.eq.s32.totalorder %s26, 0
      %p111 = por %p109, %p110
      %p112 = scmp.ne.s32.totalorder %s98, %s99
      %p113 = scmp.eq.s32.totalorder %s27, 1
      %p114 = por %p112, %p113
      %p116 = scmp.ne.s32.totalorder %s99, %s115
      %p117 = scmp.eq.s32.totalorder %s27, 0
      %p118 = por %p116, %p117
      %s119 = ssub.s32 %s28, %s40
      %p120 = scmp.eq.s32.totalorder %s119, 0
      %s122 = sadd.s32 %s121, 1
      %s123 = scalar_select %p120, %s121, %s122
      %p126 = pneg %p120
      %p127 = scmp.eq.s32.totalorder %s21, 1
      %p128 = por %p126, %p127
      %p129 = scmp.ne.s32.totalorder %s121, %s124
      %p130 = scmp.eq.s32.totalorder %s21, 0
      %p131 = por %p129, %p130
      %p132 = scmp.ne.s32.totalorder %s121, %s124
      %p133 = scmp.eq.s32.totalorder %s26, 1
      %p134 = por %p132, %p133
      %p135 = scmp.ne.s32.totalorder %s124, %s125
      %p136 = scmp.eq.s32.totalorder %s26, 0
      %p137 = por %p135, %p136
      %p138 = scmp.ne.s32.totalorder %s124, %s125
      %p139 = scmp.eq.s32.totalorder %s27, 1
      %p140 = por %p138, %p139
      %p142 = scmp.ne.s32.totalorder %s125, %s141
      %p143 = scmp.eq.s32.totalorder %s27, 0
      %p144 = por %p142, %p143
      %s145 = ssub.s32 %s28, %s40
      %p146 = scmp.eq.s32.totalorder %s145, 0
      %s148 = sadd.s32 %s147, 1
      %s149 = scalar_select %p146, %s147, %s148
      %p152 = pneg %p146
      %p153 = scmp.eq.s32.totalorder %s21, 1
      %p154 = por %p152, %p153
      %p155 = scmp.ne.s32.totalorder %s147, %s150
      %p156 = scmp.eq.s32.totalorder %s21, 0
      %p157 = por %p155, %p156
      %p158 = scmp.ne.s32.totalorder %s147, %s150
      %p159 = scmp.eq.s32.totalorder %s26, 1
      %p160 = por %p158, %p159
      %p161 = scmp.ne.s32.totalorder %s150, %s151
      %p162 = scmp.eq.s32.totalorder %s26, 0
      %p163 = por %p161, %p162
      %p164 = scmp.ne.s32.totalorder %s150, %s151
      %p165 = scmp.eq.s32.totalorder %s27, 1
      %p166 = por %p164, %p165
      %p168 = scmp.ne.s32.totalorder %s151, %s167
      %p169 = scmp.eq.s32.totalorder %s27, 0
      %p170 = por %p168, %p169
      %s172 = sadd.s32 %s171, 1
      %p175 = scmp.eq.s32.totalorder %s21, 1
      %p176 = scmp.ne.s32.totalorder %s171, %s173
      %p177 = scmp.eq.s32.totalorder %s21, 0
      %p178 = por %p176, %p177
      %p179 = scmp.ne.s32.totalorder %s171, %s173
      %p180 = scmp.eq.s32.totalorder %s26, 1
      %p181 = por %p179, %p180
      %p182 = scmp.ne.s32.totalorder %s173, %s174
      %p183 = scmp.eq.s32.totalorder %s26, 0
      %p184 = por %p182, %p183
      %p185 = scmp.ne.s32.totalorder %s173, %s174
      %p186 = scmp.eq.s32.totalorder %s27, 1
      %p187 = por %p185, %p186
      %p189 = scmp.ne.s32.totalorder %s174, %s188
      %p190 = scmp.eq.s32.totalorder %s27, 0
      %p191 = por %p189, %p190
      %s192 = ssub.s32 %s28, %s40
      %s193 = ssub.s32 %s29, %s36
      %s194 = sor.u32 %s192, %s193
      %p195 = scmp.eq.s32.totalorder %s194, 0
      %s197 = sadd.s32 %s196, 1
      %s198 = scalar_select %p195, %s196, %s197
      %p201 = pneg %p195
      %p202 = scmp.eq.s32.totalorder %s21, 1
      %p203 = por %p201, %p202
      %p204 = scmp.ne.s32.totalorder %s196, %s199
      %p205 = scmp.eq.s32.totalorder %s21, 0
      %p206 = por %p204, %p205
      %p207 = scmp.ne.s32.totalorder %s196, %s199
      %p208 = scmp.eq.s32.totalorder %s26, 1
      %p209 = por %p207, %p208
      %p210 = scmp.ne.s32.totalorder %s199, %s200
      %p211 = scmp.eq.s32.totalorder %s26, 0
      %p212 = por %p210, %p211
      %p213 = scmp.ne.s32.totalorder %s199, %s200
      %p214 = scmp.eq.s32.totalorder %s27, 1
      %p215 = por %p213, %p214
      %p217 = scmp.ne.s32.totalorder %s200, %s216
      %p218 = scmp.eq.s32.totalorder %s27, 0
      %p219 = por %p217, %p218
      %p220 = scmp.le.s32.totalorder 1, %s21
      %p221 = scmp.lt.s32.totalorder %s21, 3
      %p222 = pnand %p220, %p221
      %p223 = pneg %p222
      // Predicated region
      $region9: #{tpu_custom_call.1} parent=5 // pred_check
        _
      $region10: #{tpu_custom_call.1} parent=5 // pred_check_branch
        %225 = sbr.rel (%p222) target = $region12
      $region11: #{tpu_custom_call.1} parent=5 // pred_region
        %s226 = ssub.s32 %s21, 1
        // Predicated region
        $region13: #{tpu_custom_call.1} parent=11 // pred_check
          %p227 = pneg %p59
        $region14: #{tpu_custom_call.1} parent=11 // pred_check_branch
          %229 = sbr.rel (%p227) target = $region16
        $region15: #{tpu_custom_call.1} parent=11 // pred_region
          %p230 = scmp.lt.s32.totalorder %s31, 0
          %s231 = scalar_select %p230, %s31, 0
          %s232 = smul.addr %s231, 8
          %s233 = scalar_lea.vmem %s0, %s232
        $region16: #{tpu_custom_call.1} parent=11 // pred_fallthru
          _
        // Predicated region
        $region17: #{tpu_custom_call.1} parent=11 // pred_check
          %p234 = pneg %p184
        $region18: #{tpu_custom_call.1} parent=11 // pred_check_branch
          %236 = sbr.rel (%p234) target = $region20
        $region19: #{tpu_custom_call.1} parent=11 // pred_region
          _
        $region20: #{tpu_custom_call.1} parent=11 // pred_fallthru
          _
      $region12: #{tpu_custom_call.1} parent=5 // pred_fallthru
        _
      %p237 = scmp.lt.s32.totalorder %s21, 2
      // Predicated region
      $region21: #{tpu_custom_call.1} parent=5 // pred_check
        %p238 = pneg %p237
      $region22: #{tpu_custom_call.1} parent=5 // pred_check_branch
        %240 = sbr.rel (%p238) target = $region24
      $region23: #{tpu_custom_call.1} parent=5 // pred_region
        // Predicated region
        $region25: #{tpu_custom_call.1} parent=23 // pred_check
          %p241 = pneg %p79
        $region26: #{tpu_custom_call.1} parent=23 // pred_check_branch
          %243 = sbr.rel (%p241) target = $region28
        $region27: #{tpu_custom_call.1} parent=23 // pred_region
          %s244 = sand.u32 %s69, 1
          %s245 = scalar_lea.sflag [#allocation3], %s244
          %s246 = sand.u32 %s69, 1
          %s247 = smul.addr %s246, 16
          %s248 = scalar_lea.vmem [#allocation2], %s247
          %250 = vsyncadd %s245, 0
          %s251 = smul.addr %s28, 2
          %s252 = smul.addr %s251, 8
          %s253 = scalar_lea.hbm %s1, %s252
          %s254 = sshll.u32 %s253, 4
          %s255 = int_to_ptr.hbm [resolvable:$true] %s254
          %s256 = sshll.u32 %s248, 4
          %s257 = int_to_ptr.vmem [resolvable:$true] %s256
          %262 = dma.hbm_to_vmem [thread:$0]  %s255, 256, %s257, %s245, 128, 128, 8
        $region28: #{tpu_custom_call.1} parent=23 // pred_fallthru
          _
        // Predicated region
        $region29: #{tpu_custom_call.1} parent=23 // pred_check
          %p263 = pneg %p105
        $region30: #{tpu_custom_call.1} parent=23 // pred_check_branch
          %265 = sbr.rel (%p263) target = $region32
        $region31: #{tpu_custom_call.1} parent=23 // pred_region
          %s266 = sand.u32 %s21, 1
          %s267 = scalar_lea.sflag [#allocation6], %s266
          %s268 = sand.u32 %s95, 1
          %s269 = smul.addr %s268, 64
          %s270 = scalar_lea.vmem [#allocation5], %s269
          %272 = vsyncadd %s267, 0
          %s273 = smul.addr %s28, 8
          %s274 = smul.addr %s273, 8
          %s275 = scalar_lea.hbm %s2, %s274
          %s276 = sshll.u32 %s275, 4
          %s277 = int_to_ptr.hbm [resolvable:$true] %s276
          %s278 = sshll.u32 %s270, 4
          %s279 = int_to_ptr.vmem [resolvable:$true] %s278
          %284 = dma.hbm_to_vmem [thread:$0]  %s277, 1024, %s279, %s267, 128, 128, 8
        $region32: #{tpu_custom_call.1} parent=23 // pred_fallthru
          _
        // Predicated region
        $region33: #{tpu_custom_call.1} parent=23 // pred_check
          %p285 = pneg %p131
        $region34: #{tpu_custom_call.1} parent=23 // pred_check_branch
          %287 = sbr.rel (%p285) target = $region36
        $region35: #{tpu_custom_call.1} parent=23 // pred_region
          %s288 = sand.u32 %s21, 1
          %s289 = scalar_lea.sflag [#allocation6], %s288
          %s290 = sand.u32 %s121, 1
          %s291 = scalar_lea.vmem [#allocation7], %s290
          %293 = vsyncadd %s289, 0
          %s294 = scalar_lea.hbm %s3, %s28
          %s296 = sshll.u32 %s294, 4
          %s297 = int_to_ptr.hbm [resolvable:$true] %s296
          %s298 = sshll.u32 %s291, 4
          %s299 = int_to_ptr.vmem [resolvable:$true] %s298
          %301 = dma.hbm_to_vmem [thread:$0]  %s297, 16, %s299, %s289
        $region36: #{tpu_custom_call.1} parent=23 // pred_fallthru
          _
        // Predicated region
        $region37: #{tpu_custom_call.1} parent=23 // pred_check
          %p302 = pneg %p157
        $region38: #{tpu_custom_call.1} parent=23 // pred_check_branch
          %304 = sbr.rel (%p302) target = $region40
        $region39: #{tpu_custom_call.1} parent=23 // pred_region
          %p305 = scmp.lt.s32.totalorder %s28, 1
          %s306 = scalar_select %p305, %s28, 1
          %s307 = smul.addr %s306, 4
          %s308 = scalar_lea.vmem %s4, %s307
        $region40: #{tpu_custom_call.1} parent=23 // pred_fallthru
          _
      $region24: #{tpu_custom_call.1} parent=5 // pred_fallthru
        _
      %p309 = scmp.le.s32.totalorder 1, %s21
      %p310 = scmp.lt.s32.totalorder %s21, 3
      %p311 = pnand %p309, %p310
      %p312 = pneg %p311
      // Predicated region
      $region41: #{tpu_custom_call.1} parent=5 // pred_check
        _
      $region42: #{tpu_custom_call.1} parent=5 // pred_check_branch
        %314 = sbr.rel (%p311) target = $region44
      $region43: #{tpu_custom_call.1} parent=5 // pred_region
        %s315 = ssub.s32 %s21, 1
        %s316 = sand.u32 %s72, 1
        %s317 = scalar_lea.sflag [#allocation3], %s316
        %s318 = sand.u32 %s72, 1
        %s319 = smul.addr %s318, 16
        %s320 = scalar_lea.vmem [#allocation2], %s319
        // Predicated region
        $region45: #{tpu_custom_call.1} parent=43 // pred_check
          %p321 = pneg %p85
        $region46: #{tpu_custom_call.1} parent=43 // pred_check_branch
          %323 = sbr.rel (%p321) target = $region48
        $region47: #{tpu_custom_call.1} parent=43 // pred_region
          %325 = dma.done %s317, 256
        $region48: #{tpu_custom_call.1} parent=43 // pred_fallthru
          _
        %s326 = sand.u32 %s26, 1
        %s327 = scalar_lea.sflag [#allocation6], %s326
        %s328 = sand.u32 %s98, 1
        %s329 = smul.addr %s328, 64
        %s330 = scalar_lea.vmem [#allocation5], %s329
        // Predicated region
        $region49: #{tpu_custom_call.1} parent=43 // pred_check
          %p331 = pneg %p111
        $region50: #{tpu_custom_call.1} parent=43 // pred_check_branch
          %333 = sbr.rel (%p331) target = $region52
        $region51: #{tpu_custom_call.1} parent=43 // pred_region
          %335 = dma.done %s327, 1024
        $region52: #{tpu_custom_call.1} parent=43 // pred_fallthru
          _
        %s336 = sand.u32 %s26, 1
        %s337 = scalar_lea.sflag [#allocation6], %s336
        %s338 = sand.u32 %s124, 1
        %s339 = scalar_lea.vmem [#allocation7], %s338
        // Predicated region
        $region53: #{tpu_custom_call.1} parent=43 // pred_check
          %p340 = pneg %p137
        $region54: #{tpu_custom_call.1} parent=43 // pred_check_branch
          %342 = sbr.rel (%p340) target = $region56
        $region55: #{tpu_custom_call.1} parent=43 // pred_region
          %344 = dma.done %s337, 16
        $region56: #{tpu_custom_call.1} parent=43 // pred_fallthru
          _
        %p345 = scmp.lt.s32.totalorder %s31, 0
        %s346 = scalar_select %p345, %s31, 0
        %s347 = smul.addr %s346, 8
        %s348 = scalar_lea.vmem %s0, %s347
        %p349 = pneg %p59
        %p350 = pneg %p56
        %s351 = sand.u32 %s72, 1
        %s352 = scalar_lea.sflag [#allocation3], %s351
        %s353 = sand.u32 %s72, 1
        %s354 = smul.addr %s353, 16
        %s355 = scalar_lea.vmem [#allocation2], %s354
        %p356 = pneg %p85
        %p357 = pneg %p82
        %s358 = sand.u32 %s26, 1
        %s359 = scalar_lea.sflag [#allocation6], %s358
        %s360 = sand.u32 %s98, 1
        %s361 = smul.addr %s360, 64
        %s362 = scalar_lea.vmem [#allocation5], %s361
        %p363 = pneg %p111
        %p364 = pneg %p108
        %s365 = sand.u32 %s26, 1
        %s366 = scalar_lea.sflag [#allocation6], %s365
        %s367 = sand.u32 %s124, 1
        %s368 = scalar_lea.vmem [#allocation7], %s367
        %p369 = pneg %p137
        %p370 = pneg %p134
        %p371 = scmp.lt.s32.totalorder %s30, 1
        %s372 = scalar_select %p371, %s30, 1
        %s373 = smul.addr %s372, 4
        %s374 = scalar_lea.vmem %s4, %s373
        %p375 = pneg %p163
        %p376 = pneg %p160
        %p377 = pneg %p184
        %p378 = pneg %p181
        %p379 = pneg %p212
        %p380 = pneg %p209
        %s381 = sand.u32 %s199, 1
        %s382 = scalar_lea.sflag [#allocation4], %s381
        %s383 = sand.u32 %s199, 1
        %s384 = scalar_lea.vmem [#allocation8], %s383
        %p385 = scmp.lt.s32.totalorder %s31, 0
        %s386 = scalar_select %p385, %s31, 0
        %s387 = smul.addr %s386, 8
        %s388 = scalar_lea.vmem %s0, %s387
        %p389 = scmp.lt.s32.totalorder %s30, 1
        %s390 = scalar_select %p389, %s30, 1
        %s391 = smul.addr %s390, 4
        %s392 = scalar_lea.vmem %s4, %s391
        %v393 = vld [vmem:[%s388] sm:$0xff]
        %v394 = vld [vmem:[%s392] sm:$0xf]
        %v395 = vld [vmem:[%s5] sm:$0x7]
        %v396 = vld [vmem:[%s5 + $0x4] sm:$0x7]
        %v397 = vld [vmem:[%s320] sm:$0xff]
        %v398 = vld [vmem:[%s320 + $0x8] sm:$0xff]
        %v399 = vperm.slane %v394, 0
        %vm400 = vcmask 130048
        %v402 = vsel %vm400, %v393, 0
        %404 = vmatpush.msra.mxu0 0.0
        %405 = vmatpush.msra.mxu0 0.0
        %406 = vmatpush.msra.mxu0 0.0
        %407 = vmatpush.msra.mxu0 0.0
        %408 = vmatpush.msra.mxu0 0.0
        %409 = vmatpush.msra.mxu0 0.0
        %410 = vmatpush.msra.mxu0 0.0
        %411 = vmatpush.msra.mxu0 0.0
        %412 = vmatpush.msra.mxu0 0.0
        %413 = vmatpush.msra.mxu0 0.0
        %414 = vmatpush.msra.mxu0 0.0
        %415 = vmatpush.msra.mxu0 0.0
        %416 = vmatpush.msra.mxu0 0.0
        %417 = vmatpush.msra.mxu0 0.0
        %418 = vmatpush.msra.mxu0 %v398
        %419 = vmatpush.msra.mxu0 %v397
        %420 = vmatmul.f32.gmra.mxu0 %v402
        %v421 = vpop.f32.mrf.mxu0
        %v422 = vadd.f32 %v399, %v421
        %423 = vdwg.mxu0
        %vm424 = vcmask 261120
        %v425 = vsel %vm424, %v422, 0.0
        %426 = vadd.xlane.f32.xlu0 %v425
        %v427 = vpop.xlane.xlu0 %426
        %v428 = vrcp.pop 32.0
        %v429 = vmul.f32 32.0, %v428
        %v430 = vsub.f32 1.0, %v429
        %v431 = vmul.f32 %v428, %v430
        %v432 = vadd.f32 %v428, %v431
        %vm433 = vweird.f32 %v428
        %v434 = vsel %vm433, %v428, %v432
        %v435 = vmul.f32 %v427, %v434
        %v436 = vsub.f32 %v422, %v435
        %v437 = vmul.f32 %v436, %v436
        %v438 = vsel %vm424, %v437, 0.0
        %439 = vadd.xlane.f32.xlu0 %v438
        %v440 = vpop.xlane.xlu0 %439
        %v441 = vmul.f32 %v440, %v434
        %v442 = vadd.f32 %v441, 1e-05
        %v443 = vrsqrt.pop %v442
        %v444 = vmul.f32 %v443, %v442
        %v445 = vmul.f32 %v444, %v443
        %v446 = vmul.f32 0.5, %v445
        %v447 = vsub.f32 1.5, %v446
        %v448 = vmul.f32 %v443, %v447
        %vm449 = vweird.f32 %v442
        %vm450 = vweird.f32 %v443
        %vm451 = vmor %vm449, %vm450
        %v452 = vsel %vm451, %v443, %v448
        %v453 = vmul.f32 %v436, %v452
        %v454 = vperm.slane %v395, 0
        %v455 = vmul.f32 %v453, %v454
        %v456 = vperm.slane %v396, 0
        %v457 = vadd.f32 %v455, %v456
        %v458 = vmax.f32 %v457, 0.0
        %v459 = vld [vmem:[%s330] sm:$0xff]
        %v460 = vld [vmem:[%s330 + $0x8] sm:$0xff]
        %v461 = vld [vmem:[%s330 + $0x10] sm:$0xff]
        %v462 = vld [vmem:[%s330 + $0x18] sm:$0xff]
        %v463 = vperm.slane %v394, 1
        %v465 = vsel %vm424, %v458, 0
        %467 = vmatpush.msra.mxu0 0.0
        %468 = vmatpush.msra.mxu0 0.0
        %469 = vmatpush.msra.mxu0 0.0
        %470 = vmatpush.msra.mxu0 0.0
        %471 = vmatpush.msra.mxu0 0.0
        %472 = vmatpush.msra.mxu0 0.0
        %473 = vmatpush.msra.mxu0 0.0
        %474 = vmatpush.msra.mxu0 0.0
        %475 = vmatpush.msra.mxu0 0.0
        %476 = vmatpush.msra.mxu0 0.0
        %477 = vmatpush.msra.mxu0 0.0
        %478 = vmatpush.msra.mxu0 0.0
        %479 = vmatpush.msra.mxu0 %v462
        %480 = vmatpush.msra.mxu0 %v461
        %481 = vmatpush.msra.mxu0 %v460
        %482 = vmatpush.msra.mxu0 %v459
        %483 = vmatmul.f32.gmra.mxu0 %v465
        %v484 = vpop.f32.mrf.mxu0
        %v485 = vadd.f32 %v463, %v484
        %486 = vdwg.mxu0
        %v487 = vsel %vm424, %v485, 0.0
        %488 = vadd.xlane.f32.xlu0 %v487
        %v489 = vpop.xlane.xlu0 %488
        %v490 = vmul.f32 %v489, %v434
        %v491 = vsub.f32 %v485, %v490
        %v492 = vmul.f32 %v491, %v491
        %v493 = vsel %vm424, %v492, 0.0
        %494 = vadd.xlane.f32.xlu0 %v493
        %v495 = vpop.xlane.xlu0 %494
        %v496 = vmul.f32 %v495, %v434
        %v497 = vadd.f32 %v496, 1e-05
        %v498 = vrsqrt.pop %v497
        %v499 = vmul.f32 %v498, %v497
        %v500 = vmul.f32 %v499, %v498
        %v501 = vmul.f32 0.5, %v500
        %v502 = vsub.f32 1.5, %v501
        %v503 = vmul.f32 %v498, %v502
        %vm504 = vweird.f32 %v497
        %vm505 = vweird.f32 %v498
        %vm506 = vmor %vm504, %vm505
        %v507 = vsel %vm506, %v498, %v503
        %v508 = vmul.f32 %v491, %v507
        %v509 = vperm.slane %v395, 1
        %v510 = vmul.f32 %v508, %v509
        %v511 = vperm.slane %v396, 1
        %v512 = vadd.f32 %v510, %v511
        %v513 = vmax.f32 %v512, 0.0
        %s514 = scalar_lea.vmem %s330, 32 [#allocation5]
        %v515 = vld [vmem:[%s514] sm:$0xff]
        %v516 = vld [vmem:[%s514 + $0x8] sm:$0xff]
        %v517 = vld [vmem:[%s514 + $0x10] sm:$0xff]
        %v518 = vld [vmem:[%s514 + $0x18] sm:$0xff]
        %v519 = vperm.slane %v394, 2
        %v521 = vsel %vm424, %v513, 0
        %523 = vmatpush.msra.mxu0 0.0
        %524 = vmatpush.msra.mxu0 0.0
        %525 = vmatpush.msra.mxu0 0.0
        %526 = vmatpush.msra.mxu0 0.0
        %527 = vmatpush.msra.mxu0 0.0
        %528 = vmatpush.msra.mxu0 0.0
        %529 = vmatpush.msra.mxu0 0.0
        %530 = vmatpush.msra.mxu0 0.0
        %531 = vmatpush.msra.mxu0 0.0
        %532 = vmatpush.msra.mxu0 0.0
        %533 = vmatpush.msra.mxu0 0.0
        %534 = vmatpush.msra.mxu0 0.0
        %535 = vmatpush.msra.mxu0 %v518
        %536 = vmatpush.msra.mxu0 %v517
        %537 = vmatpush.msra.mxu0 %v516
        %538 = vmatpush.msra.mxu0 %v515
        %539 = vmatmul.f32.gmra.mxu0 %v521
        %v540 = vpop.f32.mrf.mxu0
        %v541 = vadd.f32 %v519, %v540
        %542 = vdwg.mxu0
        %v543 = vsel %vm424, %v541, 0.0
        %544 = vadd.xlane.f32.xlu0 %v543
        %v545 = vpop.xlane.xlu0 %544
        %v546 = vmul.f32 %v545, %v434
        %v547 = vsub.f32 %v541, %v546
        %v548 = vmul.f32 %v547, %v547
        %v549 = vsel %vm424, %v548, 0.0
        %550 = vadd.xlane.f32.xlu0 %v549
        %v551 = vpop.xlane.xlu0 %550
        %v552 = vmul.f32 %v551, %v434
        %v553 = vadd.f32 %v552, 1e-05
        %v554 = vrsqrt.pop %v553
        %v555 = vmul.f32 %v554, %v553
        %v556 = vmul.f32 %v555, %v554
        %v557 = vmul.f32 0.5, %v556
        %v558 = vsub.f32 1.5, %v557
        %v559 = vmul.f32 %v554, %v558
        %vm560 = vweird.f32 %v553
        %vm561 = vweird.f32 %v554
        %vm562 = vmor %vm560, %vm561
        %v563 = vsel %vm562, %v554, %v559
        %v564 = vmul.f32 %v547, %v563
        %v565 = vperm.slane %v395, 2
        %v566 = vmul.f32 %v564, %v565
        %v567 = vperm.slane %v396, 2
        %v568 = vadd.f32 %v566, %v567
        %v569 = vmax.f32 %v568, 0.0
        %v570 = vld [vmem:[%s339] sm:$0x1]
        %572 = vset.pattern.permute.xlu0 0
        %573 = vperm.xlu0 %572, %v394
        %v574 = vpop.permute.xlu0 %573
        %v575 = vrot.slane %v574, 3
        %v578 = vsel %vm424, %v570, 0
        %v581 = vsel %vm424, %v569, 0
        %583 = vmatpush.xpose.msra.mxu0 0.0
        %584 = vmatpush.xpose.msra.mxu0 0.0
        %585 = vmatpush.xpose.msra.mxu0 0.0
        %586 = vmatpush.xpose.msra.mxu0 0.0
        %587 = vmatpush.xpose.msra.mxu0 0.0
        %588 = vmatpush.xpose.msra.mxu0 0.0
        %589 = vmatpush.xpose.msra.mxu0 0.0
        %590 = vmatpush.xpose.msra.mxu0 0.0
        %591 = vmatpush.xpose.msra.mxu0 0.0
        %592 = vmatpush.xpose.msra.mxu0 0.0
        %593 = vmatpush.xpose.msra.mxu0 0.0
        %594 = vmatpush.xpose.msra.mxu0 0.0
        %595 = vmatpush.xpose.msra.mxu0 0.0
        %596 = vmatpush.xpose.msra.mxu0 0.0
        %597 = vmatpush.xpose.msra.mxu0 0.0
        %598 = vmatpush.xpose.msra.mxu0 %v581
        %599 = vmatmul.f32.gmra.mxu0 %v578
        %v600 = vpop.f32.mrf.mxu0
        %v601 = vadd.f32 %v575, %v600
        %602 = vdwg.mxu0
        %vm603 = vcmask 57344
        %604 = vst.msk [vmem:[%s384] sm:$0x1] %vm603, %v601
        %s605 = sand.u32 %s199, 1
        %s606 = scalar_lea.sflag [#allocation4], %s605
        %s607 = sand.u32 %s199, 1
        %s608 = scalar_lea.vmem [#allocation8], %s607
        // Predicated region
        $region57: #{tpu_custom_call.1} parent=43 // pred_check
          %p609 = pneg %p209
        $region58: #{tpu_custom_call.1} parent=43 // pred_check_branch
          %611 = sbr.rel (%p609) target = $region60
        $region59: #{tpu_custom_call.1} parent=43 // pred_region
          %613 = vsyncadd %s606, 0
          %s614 = sadd.s32 %s31, %s30
          %s615 = scalar_lea.hbm %s6, %s614
          %s617 = sshll.u32 %s608, 4
          %s618 = int_to_ptr.vmem [resolvable:$true] %s617
          %s619 = sshll.u32 %s615, 4
          %s620 = int_to_ptr.hbm [resolvable:$true] %s619
          %622 = dma.vmem_to_hbm [thread:$0]  %s618, 16, %s620, %s606
        $region60: #{tpu_custom_call.1} parent=43 // pred_fallthru
          _
      $region44: #{tpu_custom_call.1} parent=5 // pred_fallthru
        _
      %p623 = scmp.le.s32.totalorder 2, %s21
      // Predicated region
      $region61: #{tpu_custom_call.1} parent=5 // pred_check
        %p624 = pneg %p623
      $region62: #{tpu_custom_call.1} parent=5 // pred_check_branch
        %626 = sbr.rel (%p624) target = $region64
      $region63: #{tpu_custom_call.1} parent=5 // pred_region
        %s627 = ssub.s32 %s21, 2
        // Predicated region
        $region65: #{tpu_custom_call.1} parent=63 // pred_check
          %p628 = pneg %p215
        $region66: #{tpu_custom_call.1} parent=63 // pred_check_branch
          %630 = sbr.rel (%p628) target = $region68
        $region67: #{tpu_custom_call.1} parent=63 // pred_region
          %s631 = sand.u32 %s200, 1
          %s632 = scalar_lea.sflag [#allocation4], %s631
          %s633 = sand.u32 %s200, 1
          %s634 = scalar_lea.vmem [#allocation8], %s633
          %636 = dma.done %s632, 16
        $region68: #{tpu_custom_call.1} parent=63 // pred_fallthru
          _
      $region64: #{tpu_custom_call.1} parent=5 // pred_fallthru
        _
    $region6: #{tpu_custom_call.1} parent=1 // loop_footer
      %s25 = sadd.s32 1, %s21
    $region7: #{tpu_custom_call.1} parent=1 // loop_footer_branch
      %20 = sbr.rel target = $region3
    $region8: #{tpu_custom_call.1} parent=1 // loop_exit
      _
    %637 = vsyncpa [#allocation3], 1
    %s638 = scalar_lea.sflag [#allocation3], 1
    %639 = vsyncpa %s638, 1
    %640 = vsyncpa [#allocation6], 1
    %s641 = scalar_lea.sflag [#allocation6], 1
    %642 = vsyncpa %s641, 1
    %643 = vsyncpa [#allocation4], 1
    %s644 = scalar_lea.sflag [#allocation4], 1
    %645 = vsyncpa %s644, 1

</llo_original>
